<compile_context>
chip_gen: v5e
topology: v5e:2x2
jax: 0.10.0
libtpu: 0.0.40
codegen_flags: <defaults>
</compile_context>

<pallas_src>
import numpy as np
import jax
import jax.numpy as jnp
from jax import lax
from jax.experimental import pallas as pl
from jax.experimental.pallas import tpu as pltpu

try:  # exact Hungarian; falls back to the vectorized numpy implementation below
    from scipy.optimize import linear_sum_assignment as _scipy_lsa
except Exception:  # pragma: no cover
    _scipy_lsa = None

_NEG = -1.0e30                      # "minus infinity" padding (exp underflows to 0 in f32)
_VMEM_LIMIT = 32 * 1024 * 1024      # safe on v5e/v6e/v7x; tiles below stay far under it


def _round_up(x, m):
    return ((x + m - 1) // m) * m


def _choose_row_tile(n, max_tile=512, min_steps=1):
    """Row tile: multiple of 16 (clean bf16 sublane packing), capped at max_tile,
    shrunk (>=16) until the grid has >= min_steps steps when rows allow it
    (v7x megacore sharding / pipeline overlap). Returns (tile, padded_rows)."""
    n16 = max(_round_up(n, 16), 16)
    tile = n16 if n16 <= max_tile else max_tile
    while min_steps > 1 and tile > 16 and -(-n16 // tile) < min_steps:
        tile = max(16, _round_up(tile // 2, 16))
    return tile, _round_up(n16, tile)


def _safe_div(num, den):
    return jnp.where(den > 0, num / jnp.maximum(den, 1e-12), jnp.zeros_like(num))


# ----------------------------------------------------------------------------
# Pallas kernel 1: fused matcher cost matrix (softmax + MXU matmul)
# ----------------------------------------------------------------------------
def _matcher_cost_kernel_factory(segments):
    """segments: static tuple of (start, end) lane offsets (multiples of 128)."""
    segments = tuple(segments)

    def kernel(x_ref, oh_ref, cost_ref):
        acc = None
        for a, b in segments:
            seg = x_ref[:, a:b]                                   # static lane-aligned slice
            m = jnp.max(seg, axis=-1, keepdims=True)
            e = jnp.exp(seg - m)
            inv = pl.reciprocal(jnp.sum(e, axis=-1, keepdims=True), approx=True)  # EUP slot
            p = (e * inv).astype(jnp.bfloat16)
            # Per-segment MXU dot accumulated in f32 registers: no bf16 staging
            # scratch round-trip through VMEM (frees the single vst slot).
            d = jnp.dot(p, oh_ref[a:b, :], preferred_element_type=jnp.float32)
            acc = d if acc is None else acc + d
        cost_ref[...] = acc

    return kernel


def matcher_cost_pallas(x_cat, oh_cat, segments, tile_n):
    """x_cat: [N_pad, K] f32 logits, oh_cat: [K, Gp] bf16 -> cost [N_pad, Gp] f32."""
    N_pad, K = x_cat.shape
    _, Gp = oh_cat.shape
    grid = (N_pad // tile_n,)
    return pl.pallas_call(
        _matcher_cost_kernel_factory(segments),
        out_shape=jax.ShapeDtypeStruct((N_pad, Gp), jnp.float32),
        grid_spec=pltpu.PrefetchScalarGridSpec(
            num_scalar_prefetch=0,
            grid=grid,
            in_specs=[pl.BlockSpec((tile_n, K), lambda i: (i, 0)),
                      # constant index_map -> fetched once, resident across grid
                      pl.BlockSpec((K, Gp), lambda i: (0, 0))],
            out_specs=pl.BlockSpec((tile_n, Gp), lambda i: (i, 0)),
        ),
        compiler_params=pltpu.CompilerParams(
            dimension_semantics=("parallel",),
            vmem_limit_bytes=_VMEM_LIMIT),
    )(x_cat, oh_cat)


# ----------------------------------------------------------------------------
# Pallas kernel 2: fused weighted cross-entropy with in-kernel group reduction
# ----------------------------------------------------------------------------
def _fused_wce_kernel(x_ref, aux_ref, wnll_ref, wsum_ref):
    @pl.when(pl.program_id(1) == 0)
    def _():
        wnll_ref[...] = jnp.zeros(wnll_ref.shape, wnll_ref.dtype)
        wsum_ref[...] = jnp.zeros(wsum_ref.shape, wsum_ref.dtype)

    x = x_ref[...]                                        # [T, W] f32
    tgt = aux_ref[:, 0:1].astype(jnp.int32)               # [T, 1] target index
    w = aux_ref[:, 1:2]                                    # [T, 1] per-row class weight
    gid = aux_ref[:, 2:3].astype(jnp.int32)                # [T, 1] loss-group id

    m = jnp.max(x, axis=-1, keepdims=True)
    lse = jnp.log(jnp.sum(jnp.exp(x - m), axis=-1, keepdims=True)) + m        # [T, 1]
    lane = lax.broadcasted_iota(jnp.int32, x.shape, 1)                         # [T, W]
    tgt_logit = jnp.sum(jnp.where(lane == tgt, x, 0.0), axis=-1, keepdims=True)
    wnll = w * (lse - tgt_logit)                           # [T, 1] weight * nll (0 for pad rows)

    gp = wnll_ref.shape[-1]
    giota = lax.broadcasted_iota(jnp.int32, (x.shape[0], gp), 1)               # [T, GP]
    gmask = (giota == gid).astype(jnp.float32)
    wnll_ref[...] += jnp.sum(wnll * gmask, axis=0, keepdims=True)[None]        # [1, 1, GP]
    wsum_ref[...] += jnp.sum(w * gmask, axis=0, keepdims=True)[None]


def fused_weighted_ce_pallas(x, aux, tile_r):
    """x: [R_pad, W] f32 logits (lane-padded with _NEG), aux: [R_pad, 128] f32 with
    lane0=target idx, lane1=row weight, lane2=group id.
    Returns per-group (sum(w*nll), sum(w)) vectors of length 128."""
    R_pad, W = x.shape
    GP = aux.shape[-1]
    total_steps = R_pad // tile_r
    nsplit = 2 if total_steps >= 2 else 1                  # 2-way core split (v7x megacore)
    steps = -(-total_steps // nsplit)
    R_full = nsplit * steps * tile_r
    if R_full > R_pad:                                     # weight-0 pad rows contribute 0
        x = jnp.pad(x, ((0, R_full - R_pad), (0, 0)))
        aux = jnp.pad(aux, ((0, R_full - R_pad), (0, 0)))

    wnll, wsum = pl.pallas_call(
        _fused_wce_kernel,
        out_shape=(jax.ShapeDtypeStruct((nsplit, 1, GP), jnp.float32),
                   jax.ShapeDtypeStruct((nsplit, 1, GP), jnp.float32)),
        grid_spec=pltpu.PrefetchScalarGridSpec(
            num_scalar_prefetch=0,
            grid=(nsplit, steps),
            in_specs=[pl.BlockSpec((tile_r, W), lambda s, i: (s * steps + i, 0)),
                      pl.BlockSpec((tile_r, GP), lambda s, i: (s * steps + i, 0))],
            out_specs=(pl.BlockSpec((1, 1, GP), lambda s, i: (s, 0, 0)),
                       pl.BlockSpec((1, 1, GP), lambda s, i: (s, 0, 0))),
        ),
        compiler_params=pltpu.CompilerParams(
            dimension_semantics=("parallel", "arbitrary"),
            vmem_limit_bytes=_VMEM_LIMIT),
    )(x, aux)
    return jnp.sum(wnll[:, 0, :], axis=0), jnp.sum(wsum[:, 0, :], axis=0)


# ----------------------------------------------------------------------------
# Host-side exact Hungarian (Jonker-Volgenant, inner scan vectorized in numpy)
# ----------------------------------------------------------------------------
def _hungarian(C):
    """C: [n, m] with n <= m. Returns assigned column per row (length n)."""
    C = np.asarray(C, dtype=np.float64)
    n, m = C.shape
    u = np.zeros(n + 1)
    v = np.zeros(m + 1)
    p = np.zeros(m + 1, dtype=np.int64)
    way = np.zeros(m + 1, dtype=np.int64)
    col_ids = np.arange(1, m + 1)
    for i in range(1, n + 1):
        p[0] = i
        j0 = 0
        minv = np.full(m + 1, np.inf)
        used = np.zeros(m + 1, dtype=bool)
        while True:
            used[j0] = True
            i0 = p[j0]
            free = col_ids[~used[1:]]                           # unvisited columns (1-based)
            cur = C[i0 - 1, free - 1] - u[i0] - v[free]         # vectorized reduced costs
            better = cur < minv[free]
            minv[free] = np.where(better, cur, minv[free])
            way[free] = np.where(better, j0, way[free])
            k = int(np.argmin(minv[free]))
            j1 = int(free[k])
            delta = minv[j1]
            used_idx = np.nonzero(used)[0]
            np.add.at(u, p[used_idx], delta)
            v[used_idx] -= delta
            minv[~used] -= delta
            j0 = j1
            if p[j0] == 0:
                break
        while j0 != 0:                                          # augment
            j1 = int(way[j0])
            p[j0] = p[j1]
            j0 = j1
    ans = np.zeros(n, dtype=np.int64)
    for j in range(1, m + 1):
        if p[j] != 0:
            ans[p[j] - 1] = j - 1
    return ans


# TODO(synk): linear_sum_assignment is inherently sequential, data-dependent
# combinatorics with no Pallas equivalent; solved exactly on host.
def _linear_sum_assignment(cost):
    cost = np.asarray(cost, dtype=np.float64)
    n_rows, n_cols = cost.shape
    if n_rows == 0 or n_cols == 0:
        z = np.zeros(0, dtype=np.int64)
        return z, z
    if _scipy_lsa is not None:
        r, c = _scipy_lsa(cost)
        return np.asarray(r, np.int64), np.asarray(c, np.int64)
    if n_rows <= n_cols:
        rows = np.arange(n_rows, dtype=np.int64)
        cols = _hungarian(cost)
    else:
        cols = np.arange(n_cols, dtype=np.int64)
        rows = _hungarian(cost.T)
    order = np.argsort(rows)
    return rows[order], cols[order]


# ----------------------------------------------------------------------------
# Matcher
# ----------------------------------------------------------------------------
class HungarianMatcherJAX:
    def __init__(self, loss_weight, matcher):
        assert matcher == "avg", "only 'avg' matcher implemented"
        self.cost_relation = float(loss_weight["relation"])
        self.cost_head = float(loss_weight["head_entity"])
        self.cost_tail = float(loss_weight["tail_entity"])

    def __call__(self, outputs, targets):
        bsz, nq, C = outputs["pred_rel_logits"].shape
        L = outputs["head_start_logits"].shape[-1]
        N = bsz * nq
        Cp = _round_up(C, 128)
        Lp = _round_up(L, 128)
        offs = [0, Cp, Cp + Lp, Cp + 2 * Lp, Cp + 3 * Lp]
        widths = [Cp, Lp, Lp, Lp, Lp]
        K = Cp + 4 * Lp

        def pad_lanes(x2d, width):
            return jnp.pad(x2d.astype(jnp.float32),
                           ((0, 0), (0, width - x2d.shape[-1])),
                           constant_values=_NEG)

        x_cat = jnp.concatenate([
            pad_lanes(outputs["pred_rel_logits"].reshape(N, C), Cp),
            pad_lanes(outputs["head_start_logits"].reshape(N, L), Lp),
            pad_lanes(outputs["head_end_logits"].reshape(N, L), Lp),
            pad_lanes(outputs["tail_start_logits"].reshape(N, L), Lp),
            pad_lanes(outputs["tail_end_logits"].reshape(N, L), Lp),
        ], axis=-1)                                            # [N, K]

        keys = ["relation", "head_start_index", "head_end_index",
                "tail_start_index", "tail_end_index"]
        native = {"relation": C, "head_start_index": L, "head_end_index": L,
                  "tail_start_index": L, "tail_end_index": L}
        gold = {k: np.concatenate([np.asarray(t[k]).reshape(-1) for t in targets]
                                  ).astype(np.int64)
                for k in keys}
        for k in keys:   # an out-of-range gold index would silently hit padding lanes
            assert gold[k].size == 0 or (gold[k].min() >= 0 and gold[k].max() < native[k]), \
                f"gold index out of range for {k}"
        G = int(gold["relation"].shape[0])
        Gp = max(_round_up(max(G, 1), 128), 128)               # lane-dense output width

        # Weight- and sign-folded one-hot gather matrix -> single fused matmul.
        # (Entries 0 / -weight/2 are exactly representable in bf16.)
        scales = [self.cost_relation,
                  0.5 * self.cost_head, 0.5 * self.cost_head,
                  0.5 * self.cost_tail, 0.5 * self.cost_tail]
        oh = np.zeros((K, Gp), np.float32)
        cols = np.arange(G)
        for off, sc, k in zip(offs, scales, keys):
            oh[off + gold[k], cols] = -sc

        tile_n, N_pad = _choose_row_tile(N, max_tile=512, min_steps=2)
        if N_pad > N:
            x_cat = jnp.pad(x_cat, ((0, N_pad - N), (0, 0)))

        segments = tuple((o, o + w) for o, w in zip(offs, widths))
        # NOTE: probabilities are rounded to bf16 at the MXU boundary (~3 sig.
        # digits); near-tied costs could yield a different (equally good) matching
        # than an f32 reference.
        cost = matcher_cost_pallas(x_cat, jnp.asarray(oh, dtype=jnp.bfloat16),
                                   segments, tile_n)
        # TODO(synk): this device->host sync blocks; overlap with CE slab building
        # is limited because the slabs need the assignment indices.
        cost_np = np.asarray(jax.device_get(cost))[:N, :G].reshape(bsz, nq, G)

        sizes = [int(np.asarray(t["relation"]).reshape(-1).shape[0]) for t in targets]
        indices, off = [], 0
        for b in range(bsz):
            c = cost_np[b][:, off:off + sizes[b]]
            off += sizes[b]
            indices.append(_linear_sum_assignment(c))
        return indices


# ----------------------------------------------------------------------------
# Criterion
# ----------------------------------------------------------------------------
class SetCriterionJAX:
    # group ids inside the fused CE kernel
    # 0: relation, 1: head_start, 2: head_end, 3: tail_start, 4: tail_end

    def __init__(self, num_classes, loss_weight, na_coef, losses, matcher):
        self.num_classes = num_classes
        self.loss_weight = loss_weight
        self.matcher = HungarianMatcherJAX(loss_weight, matcher)
        self.losses = losses
        rel_weight = np.ones(num_classes + 1, np.float32)
        rel_weight[-1] = na_coef
        self.rel_weight_np = rel_weight

    def forward(self, outputs, targets):
        indices = self.matcher(outputs, targets)
        losses = {}

        need_rel = "relation" in self.losses
        need_ent = "entity" in self.losses and not self.empty_targets(targets)

        if need_rel or need_ent:
            bsz, nq, C = outputs["pred_rel_logits"].shape
            L = outputs["head_start_logits"].shape[-1]

            # (logits [n, w_native] (device), target idx (np), per-row weight (np), group id)
            row_specs = []

            if need_rel:
                target_classes = np.full((bsz, nq), self.num_classes, dtype=np.int64)
                for b, (src, tgt) in enumerate(indices):
                    src = np.asarray(src, dtype=np.int64)
                    tgt = np.asarray(tgt, dtype=np.int64)
                    if src.size:
                        rel_b = np.asarray(targets[b]["relation"]).reshape(-1)
                        target_classes[b, src] = rel_b[tgt]
                tc = target_classes.reshape(-1)
                row_specs.append((outputs["pred_rel_logits"].reshape(bsz * nq, C),
                                  tc, self.rel_weight_np[tc], 0))

            if need_ent:
                batch_idx = np.concatenate(
                    [np.full(len(np.asarray(src)), i, dtype=np.int64)
                     for i, (src, _) in enumerate(indices)])
                src_idx = np.concatenate(
                    [np.asarray(src, dtype=np.int64) for src, _ in indices])

                def tgt_cat(name):
                    return np.concatenate(
                        [np.asarray(t[name]).reshape(-1)[np.asarray(j, dtype=np.int64)]
                         for t, (_, j) in zip(targets, indices)]).astype(np.int64)

                ent = [("head_start_logits", "head_start_index", 1),
                       ("head_end_logits", "head_end_index", 2),
                       ("tail_start_logits", "tail_start_index", 3),
                       ("tail_end_logits", "tail_end_index", 4)]
                for lg_key, tg_key, gid in ent:
                    sel = outputs[lg_key][batch_idx, src_idx]          # [Nsel, L]
                    tg = tgt_cat(tg_key)
                    row_specs.append((sel, tg, np.ones(tg.shape[0], np.float32), gid))

            # Group CE rows by padded lane width so the narrow relation rows never
            # get padded up to the entity (seq_len) width; one fused call per width.
            width_groups = {}
            for spec in row_specs:
                Wp = _round_up(max(int(spec[0].shape[-1]), 1), 128)
                width_groups.setdefault(Wp, []).append(spec)

            GP = 128
            wnll_tot = jnp.zeros((GP,), jnp.float32)
            wsum_tot = jnp.zeros((GP,), jnp.float32)
            for Wp, specs in width_groups.items():
                R = sum(int(s[0].shape[0]) for s in specs)
                tile_r, R_pad = _choose_row_tile(R, max_tile=512, min_steps=2)
                # Narrow aux stream replaces the dense [R, W] weighted one-hot and
                # [R, 128] group streams: lane0=target idx, lane1=weight, lane2=gid.
                aux = np.zeros((R_pad, GP), np.float32)
                x_blocks = []
                off = 0
                for lg, tg, wt, gid in specs:
                    n, w_nat = int(lg.shape[0]), int(lg.shape[-1])
                    assert tg.size == 0 or (tg.min() >= 0 and tg.max() < w_nat), \
                        "CE target index out of range"
                    rows = off + np.arange(n)
                    aux[rows, 0] = tg
                    aux[rows, 1] = wt
                    aux[rows, 2] = float(gid)
                    x_blocks.append(jnp.pad(lg.astype(jnp.float32),
                                            ((0, 0), (0, Wp - w_nat)),
                                            constant_values=_NEG))
                    off += n
                x = jnp.concatenate(x_blocks, axis=0) if len(x_blocks) > 1 else x_blocks[0]
                if R_pad > R:
                    x = jnp.pad(x, ((0, R_pad - R), (0, 0)))   # weight-0 rows contribute 0
                wnll, wsum = fused_weighted_ce_pallas(x, jnp.asarray(aux), tile_r)
                wnll_tot = wnll_tot + wnll
                wsum_tot = wsum_tot + wsum

            if need_rel:
                # guarded against sum(w)==0 (e.g. na_coef==0 with all-NA targets)
                losses["relation"] = _safe_div(wnll_tot[0], wsum_tot[0])
            if need_ent:
                hs = _safe_div(wnll_tot[1], wsum_tot[1])
                he = _safe_div(wnll_tot[2], wsum_tot[2])
                ts = _safe_div(wnll_tot[3], wsum_tot[3])
                te = _safe_div(wnll_tot[4], wsum_tot[4])
                losses["head_entity"] = 0.5 * (hs + he)
                losses["tail_entity"] = 0.5 * (ts + te)

        if "cardinality" in self.losses:
            losses.update(self.loss_cardinality(outputs, targets, indices))

        total = sum(losses[k] * self.loss_weight[k]
                    for k in losses.keys() if k in self.loss_weight)
        return total

    def loss_cardinality(self, outputs, targets, indices):
        pred_rel_logits = outputs["pred_rel_logits"]
        tgt_lengths = jnp.asarray(
            [len(np.asarray(v["labels"]).reshape(-1)) for v in targets], dtype=jnp.float32)
        card_pred = jnp.sum(
            (jnp.argmax(pred_rel_logits, axis=-1) != pred_rel_logits.shape[-1] - 1), axis=1)
        card_err = jnp.mean(jnp.abs(card_pred.astype(jnp.float32) - tgt_lengths))
        return {"cardinality_error": card_err}

    @staticmethod
    def empty_targets(targets):
        return all(len(np.asarray(t["relation"]).reshape(-1)) == 0 for t in targets)


# ----------------------------------------------------------------------------
# Demo
# ----------------------------------------------------------------------------
if __name__ == "__main__":
    bsz, num_generated_triples, seq_len = 2, 10, 8
    num_classes = 5                 # len(predicate2id)
    C = num_classes + 1             # relation classes + NA

    key = jax.random.PRNGKey(0)
    k0, k1, k2, k3, k4 = jax.random.split(key, 5)
    outputs = {
        "pred_rel_logits": jax.random.normal(k0, (bsz, num_generated_triples, C), jnp.float32),
        "head_start_logits": jax.random.normal(k1, (bsz, num_generated_triples, seq_len), jnp.float32),
        "head_end_logits": jax.random.normal(k2, (bsz, num_generated_triples, seq_len), jnp.float32),
        "tail_start_logits": jax.random.normal(k3, (bsz, num_generated_triples, seq_len), jnp.float32),
        "tail_end_logits": jax.random.normal(k4, (bsz, num_generated_triples, seq_len), jnp.float32),
    }

    targets = [
        {"relation": np.array([1, 3]),
         "head_start_index": np.array([0, 2]),
         "head_end_index": np.array([1, 3]),
         "tail_start_index": np.array([4, 5]),
         "tail_end_index": np.array([5, 6]),
         "labels": np.array([1, 3])},
        {"relation": np.array([0, 2, 4]),
         "head_start_index": np.array([1, 3, 6]),
         "head_end_index": np.array([2, 4, 7]),
         "tail_start_index": np.array([0, 5, 2]),
         "tail_end_index": np.array([1, 6, 3]),
         "labels": np.array([0, 2, 4])},
    ]

    loss_weight = {"relation": 1.0, "head_entity": 2.0, "tail_entity": 2.0}
    criterion = SetCriterionJAX(num_classes=num_classes,
                                loss_weight=loss_weight,
                                na_coef=0.25,
                                losses=["entity", "relation"],
                                matcher="avg")

    loss = criterion.forward(outputs, targets)
    jax.block_until_ready(loss)
    assert bool(jnp.isfinite(loss))
    print("KERNEL_OK")
</pallas_src>

<mosaic_0001>
module attributes {stable_mosaic.version = 11 : i64} {
  func.func @kernel(%arg0: i32, %arg1: memref<16x640xf32, #tpu.memory_space<vmem>>, %arg2: memref<640x128xbf16, #tpu.memory_space<vmem>>, %arg3: memref<16x128xf32, #tpu.memory_space<vmem>>) attributes {dimension_semantics = [#tpu.dimension_semantics<parallel>], iteration_bounds = array<i64: 2>, scalar_prefetch = 0 : i64, scratch_operands = 0 : i64, tpu.core_type = #tpu.core_type<tc>, window_params = [{transform_indices = @transform_0, window_bounds = array<i64: 16, 640>}, {pipeline_mode = #tpu.pipeline_mode<synchronous>, transform_indices = @transform_1, window_bounds = array<i64: 640, 128>}, {transform_indices = @transform_2, window_bounds = array<i64: 16, 128>}]} {
    %c0 = arith.constant 0 : index
    %c0_0 = arith.constant 0 : index
    %0 = vector.load %arg1[%c0, %c0_0] : memref<16x640xf32, #tpu.memory_space<vmem>>, vector<16x128xf32>
    %cst = arith.constant dense<0xFF800000> : vector<16xf32>
    %1 = vector.multi_reduction <maximumf>, %0, %cst [1] : vector<16x128xf32> to vector<16xf32>
    %2 = vector.shape_cast %1 : vector<16xf32> to vector<16x1xf32>
    %3 = vector.broadcast %2 : vector<16x1xf32> to vector<16x128xf32>
    %4 = arith.subf %0, %3 : vector<16x128xf32>
    %5 = math.exp %4 : vector<16x128xf32>
    %cst_1 = arith.constant dense<0.000000e+00> : vector<16xf32>
    %6 = vector.multi_reduction <add>, %5, %cst_1 [1] : vector<16x128xf32> to vector<16xf32>
    %7 = vector.shape_cast %6 : vector<16xf32> to vector<16x1xf32>
    %8 = tpu.reciprocal %7 {approx = true} : vector<16x1xf32> -> vector<16x1xf32>
    %9 = vector.broadcast %8 : vector<16x1xf32> to vector<16x128xf32>
    %10 = arith.mulf %5, %9 : vector<16x128xf32>
    %11 = arith.truncf %10 : vector<16x128xf32> to vector<16x128xbf16>
    %c0_2 = arith.constant 0 : index
    %c0_3 = arith.constant 0 : index
    %12 = vector.load %arg2[%c0_2, %c0_3] : memref<640x128xbf16, #tpu.memory_space<vmem>>, vector<128x128xbf16>
    %cst_4 = arith.constant dense<0.000000e+00> : vector<16x128xf32>
    %13 = tpu.matmul %11, %12, %cst_4 {dimension_numbers = #tpu.dot_dimension_numbers<[1], [0], [0], [1], [0, 0, 1, 1], [], []>} : vector<16x128xbf16>, vector<128x128xbf16>, vector<16x128xf32> -> vector<16x128xf32>
    %c0_5 = arith.constant 0 : index
    %c128 = arith.constant 128 : index
    %14 = vector.load %arg1[%c0_5, %c128] : memref<16x640xf32, #tpu.memory_space<vmem>>, vector<16x128xf32>
    %cst_6 = arith.constant dense<0xFF800000> : vector<16xf32>
    %15 = vector.multi_reduction <maximumf>, %14, %cst_6 [1] : vector<16x128xf32> to vector<16xf32>
    %16 = vector.shape_cast %15 : vector<16xf32> to vector<16x1xf32>
    %17 = vector.broadcast %16 : vector<16x1xf32> to vector<16x128xf32>
    %18 = arith.subf %14, %17 : vector<16x128xf32>
    %19 = math.exp %18 : vector<16x128xf32>
    %cst_7 = arith.constant dense<0.000000e+00> : vector<16xf32>
    %20 = vector.multi_reduction <add>, %19, %cst_7 [1] : vector<16x128xf32> to vector<16xf32>
    %21 = vector.shape_cast %20 : vector<16xf32> to vector<16x1xf32>
    %22 = tpu.reciprocal %21 {approx = true} : vector<16x1xf32> -> vector<16x1xf32>
    %23 = vector.broadcast %22 : vector<16x1xf32> to vector<16x128xf32>
    %24 = arith.mulf %19, %23 : vector<16x128xf32>
    %25 = arith.truncf %24 : vector<16x128xf32> to vector<16x128xbf16>
    %c128_8 = arith.constant 128 : index
    %c0_9 = arith.constant 0 : index
    %26 = vector.load %arg2[%c128_8, %c0_9] : memref<640x128xbf16, #tpu.memory_space<vmem>>, vector<128x128xbf16>
    %cst_10 = arith.constant dense<0.000000e+00> : vector<16x128xf32>
    %27 = tpu.matmul %25, %26, %cst_10 {dimension_numbers = #tpu.dot_dimension_numbers<[1], [0], [0], [1], [0, 0, 1, 1], [], []>} : vector<16x128xbf16>, vector<128x128xbf16>, vector<16x128xf32> -> vector<16x128xf32>
    %28 = arith.addf %13, %27 : vector<16x128xf32>
    %c0_11 = arith.constant 0 : index
    %c256 = arith.constant 256 : index
    %29 = vector.load %arg1[%c0_11, %c256] : memref<16x640xf32, #tpu.memory_space<vmem>>, vector<16x128xf32>
    %cst_12 = arith.constant dense<0xFF800000> : vector<16xf32>
    %30 = vector.multi_reduction <maximumf>, %29, %cst_12 [1] : vector<16x128xf32> to vector<16xf32>
    %31 = vector.shape_cast %30 : vector<16xf32> to vector<16x1xf32>
    %32 = vector.broadcast %31 : vector<16x1xf32> to vector<16x128xf32>
    %33 = arith.subf %29, %32 : vector<16x128xf32>
    %34 = math.exp %33 : vector<16x128xf32>
    %cst_13 = arith.constant dense<0.000000e+00> : vector<16xf32>
    %35 = vector.multi_reduction <add>, %34, %cst_13 [1] : vector<16x128xf32> to vector<16xf32>
    %36 = vector.shape_cast %35 : vector<16xf32> to vector<16x1xf32>
    %37 = tpu.reciprocal %36 {approx = true} : vector<16x1xf32> -> vector<16x1xf32>
    %38 = vector.broadcast %37 : vector<16x1xf32> to vector<16x128xf32>
    %39 = arith.mulf %34, %38 : vector<16x128xf32>
    %40 = arith.truncf %39 : vector<16x128xf32> to vector<16x128xbf16>
    %c256_14 = arith.constant 256 : index
    %c0_15 = arith.constant 0 : index
    %41 = vector.load %arg2[%c256_14, %c0_15] : memref<640x128xbf16, #tpu.memory_space<vmem>>, vector<128x128xbf16>
    %cst_16 = arith.constant dense<0.000000e+00> : vector<16x128xf32>
    %42 = tpu.matmul %40, %41, %cst_16 {dimension_numbers = #tpu.dot_dimension_numbers<[1], [0], [0], [1], [0, 0, 1, 1], [], []>} : vector<16x128xbf16>, vector<128x128xbf16>, vector<16x128xf32> -> vector<16x128xf32>
    %43 = arith.addf %28, %42 : vector<16x128xf32>
    %c0_17 = arith.constant 0 : index
    %c384 = arith.constant 384 : index
    %44 = vector.load %arg1[%c0_17, %c384] : memref<16x640xf32, #tpu.memory_space<vmem>>, vector<16x128xf32>
    %cst_18 = arith.constant dense<0xFF800000> : vector<16xf32>
    %45 = vector.multi_reduction <maximumf>, %44, %cst_18 [1] : vector<16x128xf32> to vector<16xf32>
    %46 = vector.shape_cast %45 : vector<16xf32> to vector<16x1xf32>
    %47 = vector.broadcast %46 : vector<16x1xf32> to vector<16x128xf32>
    %48 = arith.subf %44, %47 : vector<16x128xf32>
    %49 = math.exp %48 : vector<16x128xf32>
    %cst_19 = arith.constant dense<0.000000e+00> : vector<16xf32>
    %50 = vector.multi_reduction <add>, %49, %cst_19 [1] : vector<16x128xf32> to vector<16xf32>
    %51 = vector.shape_cast %50 : vector<16xf32> to vector<16x1xf32>
    %52 = tpu.reciprocal %51 {approx = true} : vector<16x1xf32> -> vector<16x1xf32>
    %53 = vector.broadcast %52 : vector<16x1xf32> to vector<16x128xf32>
    %54 = arith.mulf %49, %53 : vector<16x128xf32>
    %55 = arith.truncf %54 : vector<16x128xf32> to vector<16x128xbf16>
    %c384_20 = arith.constant 384 : index
    %c0_21 = arith.constant 0 : index
    %56 = vector.load %arg2[%c384_20, %c0_21] : memref<640x128xbf16, #tpu.memory_space<vmem>>, vector<128x128xbf16>
    %cst_22 = arith.constant dense<0.000000e+00> : vector<16x128xf32>
    %57 = tpu.matmul %55, %56, %cst_22 {dimension_numbers = #tpu.dot_dimension_numbers<[1], [0], [0], [1], [0, 0, 1, 1], [], []>} : vector<16x128xbf16>, vector<128x128xbf16>, vector<16x128xf32> -> vector<16x128xf32>
    %58 = arith.addf %43, %57 : vector<16x128xf32>
    %c0_23 = arith.constant 0 : index
    %c512 = arith.constant 512 : index
    %59 = vector.load %arg1[%c0_23, %c512] : memref<16x640xf32, #tpu.memory_space<vmem>>, vector<16x128xf32>
    %cst_24 = arith.constant dense<0xFF800000> : vector<16xf32>
    %60 = vector.multi_reduction <maximumf>, %59, %cst_24 [1] : vector<16x128xf32> to vector<16xf32>
    %61 = vector.shape_cast %60 : vector<16xf32> to vector<16x1xf32>
    %62 = vector.broadcast %61 : vector<16x1xf32> to vector<16x128xf32>
    %63 = arith.subf %59, %62 : vector<16x128xf32>
    %64 = math.exp %63 : vector<16x128xf32>
    %cst_25 = arith.constant dense<0.000000e+00> : vector<16xf32>
    %65 = vector.multi_reduction <add>, %64, %cst_25 [1] : vector<16x128xf32> to vector<16xf32>
    %66 = vector.shape_cast %65 : vector<16xf32> to vector<16x1xf32>
    %67 = tpu.reciprocal %66 {approx = true} : vector<16x1xf32> -> vector<16x1xf32>
    %68 = vector.broadcast %67 : vector<16x1xf32> to vector<16x128xf32>
    %69 = arith.mulf %64, %68 : vector<16x128xf32>
    %70 = arith.truncf %69 : vector<16x128xf32> to vector<16x128xbf16>
    %c512_26 = arith.constant 512 : index
    %c0_27 = arith.constant 0 : index
    %71 = vector.load %arg2[%c512_26, %c0_27] : memref<640x128xbf16, #tpu.memory_space<vmem>>, vector<128x128xbf16>
    %cst_28 = arith.constant dense<0.000000e+00> : vector<16x128xf32>
    %72 = tpu.matmul %70, %71, %cst_28 {dimension_numbers = #tpu.dot_dimension_numbers<[1], [0], [0], [1], [0, 0, 1, 1], [], []>} : vector<16x128xbf16>, vector<128x128xbf16>, vector<16x128xf32> -> vector<16x128xf32>
    %73 = arith.addf %58, %72 : vector<16x128xf32>
    %c0_29 = arith.constant 0 : index
    %c0_30 = arith.constant 0 : index
    %74 = vector.load %arg3[%c0_29, %c0_30] : memref<16x128xf32, #tpu.memory_space<vmem>>, vector<16x128xf32>
    tpu.vector_store %arg3[%c0_29, %c0_30], %73 {strides = array<i32>} : memref<16x128xf32, #tpu.memory_space<vmem>>, vector<16x128xf32>,
    return
  }
  func.func @transform_0(%arg0: i32) -> (i32, i32) {
    %c0_i32 = arith.constant 0 : i32
    %c0_i32_0 = arith.constant 0 : i32
    return %arg0, %c0_i32 : i32, i32
  }
  func.func @transform_1(%arg0: i32) -> (i32, i32) {
    %c0_i32 = arith.constant 0 : i32
    %c0_i32_0 = arith.constant 0 : i32
    %c0_i32_1 = arith.constant 0 : i32
    return %c0_i32, %c0_i32_0 : i32, i32
  }
  func.func @transform_2(%arg0: i32) -> (i32, i32) {
    %c0_i32 = arith.constant 0 : i32
    %c0_i32_0 = arith.constant 0 : i32
    return %arg0, %c0_i32 : i32, i32
  }
}

</mosaic_0001>

<llo_original>
// kernel: tpu_custom_call.1
$region0: #{tpu_custom_call.1}
  #allocation0 [shape = 'u32[]', space=smem, size = 0x4, offset = 0x4, fixed_abs, tag = 'smem constant byte address 0x4 - core index']
  #allocation1 [shape = 'u32[72,128]{1,0:T(1,128)}', space=vmem, size = 0x9000, scoped, tag = 'internal scratch']
  %s0 = inlined_call_operand.hbm [shape: f32[32,640], index: 0, kind: input, shape index: {}]
  %s1 = inlined_call_operand.hbm [shape: bf16[640,128], index: 1, kind: input, shape index: {}]
  %s2 = inlined_call_operand.hbm [shape: f32[32,128], index: 2, kind: output, shape index: {}]
  %s3 = sld [smem:[#allocation0]]
  $region49: #{tpu_custom_call.1} parent=0
    _
  %s5 = ssub.s32 1, %s3
  %s6 = scalar_select 0, %s5, %s3
  $region1: #{tpu_custom_call.1} parent=0
    #allocation2 [shape = 'u8[81920]{0}', space=vmem, size = 0x14000, scoped, tag = 'input window, operand 0']
    #allocation3 [shape = 's32[2]{0}', space=sflag, size = 0x8, scoped, tag = 'scoped memory for tpu_custom_call.1']
    #allocation4 [shape = 's32[2]{0}', space=sflag, size = 0x8, scoped, tag = 'scoped memory for tpu_custom_call.1']
    #allocation5 [shape = 'u8[163840]{0}', space=vmem, size = 0x28000, scoped, tag = 'input window, operand 1, single buffered']
    #allocation6 [shape = 's32[1]{0}', space=sflag, size = 0x4, scoped, tag = 'scoped memory for tpu_custom_call.1']
    #allocation7 [shape = 'u8[16384]{0}', space=vmem, size = 0x4000, scoped, tag = 'output window, operand 0']
    %7 = vsyncpa [#allocation3], 0
    %s8 = scalar_lea.sflag [#allocation3], 1
    %9 = vsyncpa %s8, 0
    %10 = vsyncpa [#allocation6], 0
    %11 = vsyncpa [#allocation4], 0
    %s12 = scalar_lea.sflag [#allocation4], 1
    %13 = vsyncpa %s12, 0
    loop: start=0, step=1, limit=4
    $region2: #{tpu_custom_call.1} parent=1 // loop_pre_header
      _
    $region3: #{tpu_custom_call.1} parent=1 // loop_header
      %s15 = sphi 0, %s19
      %p16 = scmp.ge.s32.totalorder %s15, 4
      %s25 = sphi 0, %s27
      %s28 = sphi 0, %s25
      %s29 = sphi 0, %s28
      %s45 = sphi 0, %s29
      %s49 = sphi 0, %s49
      %s51 = sphi 0, %s49
      %s52 = sphi 0, %s51
      %s66 = sphi 0, %s52
      %s72 = sphi 0, %s74
      %s75 = sphi 0, %s72
      %s76 = sphi 0, %s75
      %s92 = sphi 0, %s76
    $region4: #{tpu_custom_call.1} parent=1 // loop_header_branch
      %18 = sbr.rel (%p16) target = $region8
    $region5: #{tpu_custom_call.1} parent=1 // loop_body
      %s20 = ssub.s32 %s15, 1
      %s21 = ssub.s32 %s15, 2
      %s22 = sadd.s32 %s15, 1
      %s23 = ssub.s32 %s15, %s22
      %p24 = scmp.eq.s32.totalorder %s23, 0
      %s26 = sadd.s32 %s25, 1
      %s27 = scalar_select %p24, %s25, %s26
      %p30 = pneg %p24
      %p31 = scmp.eq.s32.totalorder %s15, 1
      %p32 = por %p30, %p31
      %p33 = scmp.ne.s32.totalorder %s25, %s28
      %p34 = scmp.eq.s32.totalorder %s15, 0
      %p35 = por %p33, %p34
      %p36 = scmp.ne.s32.totalorder %s25, %s28
      %p37 = scmp.eq.s32.totalorder %s20, 1
      %p38 = por %p36, %p37
      %p39 = scmp.ne.s32.totalorder %s28, %s29
      %p40 = scmp.eq.s32.totalorder %s20, 0
      %p41 = por %p39, %p40
      %p42 = scmp.ne.s32.totalorder %s28, %s29
      %p43 = scmp.eq.s32.totalorder %s21, 1
      %p44 = por %p42, %p43
      %p46 = scmp.ne.s32.totalorder %s29, %s45
      %p47 = scmp.eq.s32.totalorder %s21, 0
      %p48 = por %p46, %p47
      %s50 = sadd.s32 %s49, 1
      %p53 = scmp.eq.s32.totalorder %s15, 1
      %p54 = scmp.ne.s32.totalorder %s49, %s51
      %p55 = scmp.eq.s32.totalorder %s15, 0
      %p56 = por %p54, %p55
      %p57 = scmp.ne.s32.totalorder %s49, %s51
      %p58 = scmp.eq.s32.totalorder %s20, 1
      %p59 = por %p57, %p58
      %p60 = scmp.ne.s32.totalorder %s51, %s52
      %p61 = scmp.eq.s32.totalorder %s20, 0
      %p62 = por %p60, %p61
      %p63 = scmp.ne.s32.totalorder %s51, %s52
      %p64 = scmp.eq.s32.totalorder %s21, 1
      %p65 = por %p63, %p64
      %p67 = scmp.ne.s32.totalorder %s52, %s66
      %p68 = scmp.eq.s32.totalorder %s21, 0
      %p69 = por %p67, %p68
      %s70 = ssub.s32 %s15, %s22
      %p71 = scmp.eq.s32.totalorder %s70, 0
      %s73 = sadd.s32 %s72, 1
      %s74 = scalar_select %p71, %s72, %s73
      %p77 = pneg %p71
      %p78 = scmp.eq.s32.totalorder %s15, 1
      %p79 = por %p77, %p78
      %p80 = scmp.ne.s32.totalorder %s72, %s75
      %p81 = scmp.eq.s32.totalorder %s15, 0
      %p82 = por %p80, %p81
      %p83 = scmp.ne.s32.totalorder %s72, %s75
      %p84 = scmp.eq.s32.totalorder %s20, 1
      %p85 = por %p83, %p84
      %p86 = scmp.ne.s32.totalorder %s75, %s76
      %p87 = scmp.eq.s32.totalorder %s20, 0
      %p88 = por %p86, %p87
      %p89 = scmp.ne.s32.totalorder %s75, %s76
      %p90 = scmp.eq.s32.totalorder %s21, 1
      %p91 = por %p89, %p90
      %p93 = scmp.ne.s32.totalorder %s76, %s92
      %p94 = scmp.eq.s32.totalorder %s21, 0
      %p95 = por %p93, %p94
      %p96 = scmp.le.s32.totalorder 1, %s15
      %p97 = scmp.lt.s32.totalorder %s15, 3
      %p98 = pnand %p96, %p97
      %p99 = pneg %p98
      // Predicated region
      $region9: #{tpu_custom_call.1} parent=5 // pred_check
        _
      $region10: #{tpu_custom_call.1} parent=5 // pred_check_branch
        %101 = sbr.rel (%p98) target = $region12
      $region11: #{tpu_custom_call.1} parent=5 // pred_region
        %s102 = ssub.s32 %s15, 1
        // Predicated region
        $region13: #{tpu_custom_call.1} parent=11 // pred_check
          %p103 = pneg %p62
        $region14: #{tpu_custom_call.1} parent=11 // pred_check_branch
          %105 = sbr.rel (%p103) target = $region16
        $region15: #{tpu_custom_call.1} parent=11 // pred_region
          %107 = vsyncadd [#allocation6], 0
          %s108 = sshll.u32 %s1, 4
          %s109 = int_to_ptr.hbm [resolvable:$true] %s108
          %s110 = sshll.u32 [#allocation5], 4
          %s111 = int_to_ptr.vmem [resolvable:$true] %s110
          %116 = dma.hbm_to_vmem [thread:$0]  %s109, 5120, %s111, [#allocation6], 64, 64, 4
        $region16: #{tpu_custom_call.1} parent=11 // pred_fallthru
          _
      $region12: #{tpu_custom_call.1} parent=5 // pred_fallthru
        _
      %p117 = scmp.lt.s32.totalorder %s15, 2
      // Predicated region
      $region17: #{tpu_custom_call.1} parent=5 // pred_check
        %p118 = pneg %p117
      $region18: #{tpu_custom_call.1} parent=5 // pred_check_branch
        %120 = sbr.rel (%p118) target = $region20
      $region19: #{tpu_custom_call.1} parent=5 // pred_region
        // Predicated region
        $region21: #{tpu_custom_call.1} parent=19 // pred_check
          %p121 = pneg %p35
        $region22: #{tpu_custom_call.1} parent=19 // pred_check_branch
          %123 = sbr.rel (%p121) target = $region24
        $region23: #{tpu_custom_call.1} parent=19 // pred_region
          %s124 = sand.u32 %s25, 1
          %s125 = scalar_lea.sflag [#allocation3], %s124
          %s126 = sand.u32 %s25, 1
          %s127 = smul.addr %s126, 80
          %s128 = scalar_lea.vmem [#allocation2], %s127
          %s129 = smul.u32 2, %s15
          %131 = vsyncadd %s125, 0
          %s132 = smul.addr %s129, 5
          %s133 = smul.addr %s132, 8
          %s134 = scalar_lea.hbm %s0, %s133
          %s135 = sshll.u32 %s134, 4
          %s136 = int_to_ptr.hbm [resolvable:$true] %s135
          %s137 = sshll.u32 %s128, 4
          %s138 = int_to_ptr.vmem [resolvable:$true] %s137
          %143 = dma.hbm_to_vmem [thread:$0]  %s136, 1280, %s138, %s125, 640, 640, 40
        $region24: #{tpu_custom_call.1} parent=19 // pred_fallthru
          _
      $region20: #{tpu_custom_call.1} parent=5 // pred_fallthru
        _
      %p144 = scmp.le.s32.totalorder 1, %s15
      %p145 = scmp.lt.s32.totalorder %s15, 3
      %p146 = pnand %p144, %p145
      %p147 = pneg %p146
      // Predicated region
      $region25: #{tpu_custom_call.1} parent=5 // pred_check
        _
      $region26: #{tpu_custom_call.1} parent=5 // pred_check_branch
        %149 = sbr.rel (%p146) target = $region28
      $region27: #{tpu_custom_call.1} parent=5 // pred_region
        %s150 = ssub.s32 %s15, 1
        %s151 = sand.u32 %s28, 1
        %s152 = scalar_lea.sflag [#allocation3], %s151
        %s153 = sand.u32 %s28, 1
        %s154 = smul.addr %s153, 80
        %s155 = scalar_lea.vmem [#allocation2], %s154
        // Predicated region
        $region29: #{tpu_custom_call.1} parent=27 // pred_check
          %p156 = pneg %p41
        $region30: #{tpu_custom_call.1} parent=27 // pred_check_branch
          %158 = sbr.rel (%p156) target = $region32
        $region31: #{tpu_custom_call.1} parent=27 // pred_region
          %160 = dma.done %s152, 1280
        $region32: #{tpu_custom_call.1} parent=27 // pred_fallthru
          _
        // Predicated region
        $region33: #{tpu_custom_call.1} parent=27 // pred_check
          %p161 = pneg %p62
        $region34: #{tpu_custom_call.1} parent=27 // pred_check_branch
          %163 = sbr.rel (%p161) target = $region36
        $region35: #{tpu_custom_call.1} parent=27 // pred_region
          %165 = dma.done [#allocation6], 5120
        $region36: #{tpu_custom_call.1} parent=27 // pred_fallthru
          _
        %s166 = sand.u32 %s28, 1
        %s167 = scalar_lea.sflag [#allocation3], %s166
        %s168 = sand.u32 %s28, 1
        %s169 = smul.addr %s168, 80
        %s170 = scalar_lea.vmem [#allocation2], %s169
        %p171 = pneg %p41
        %p172 = pneg %p38
        %p173 = pneg %p62
        %p174 = pneg %p59
        %p175 = pneg %p88
        %p176 = pneg %p85
        %s177 = sand.u32 %s75, 1
        %s178 = scalar_lea.sflag [#allocation4], %s177
        %s179 = sand.u32 %s75, 1
        %s180 = smul.addr %s179, 16
        %s181 = scalar_lea.vmem [#allocation7], %s180
        %s182 = smul.u32 2, %s20
        %s183 = smul.u32 2, %s20
        %v184 = vld [vmem:[%s155] sm:$0xff]
        %v185 = vld [vmem:[%s155 + $0x28] sm:$0xff]
        %186 = vmax.xlane.f32.xlu0 %v184
        %v187 = vpop.xlane.xlu0 %186
        %188 = vmax.xlane.f32.xlu0 %v185
        %v189 = vpop.xlane.xlu0 %188
        %v190 = vsub.f32 %v184, %v187
        %v191 = vsub.f32 %v185, %v189
        %v192 = vmul.f32 %v190, 1.442695
        %v193 = vpow.pop %v192
        %v194 = vmul.f32 %v191, 1.442695
        %v195 = vpow.pop %v194
        %196 = vadd.xlane.f32.xlu0 %v193
        %v197 = vpop.xlane.xlu0 %196
        %198 = vadd.xlane.f32.xlu0 %v195
        %v199 = vpop.xlane.xlu0 %198
        %v200 = vrcp.pop %v197
        %v201 = vrcp.pop %v199
        %v202 = vmul.f32 %v193, %v200
        %v203 = vmul.f32 %v195, %v201
        %v204 = vpack.c.bf16 %v203, %v202
        %v205 = vld [vmem:[#allocation5] sm:$0xf]
        %v206 = vld [vmem:[#allocation5 + $0x4] sm:$0xf]
        %v207 = vld [vmem:[#allocation5 + $0x8] sm:$0xf]
        %v208 = vld [vmem:[#allocation5 + $0xc] sm:$0xf]
        %v209 = vld [vmem:[#allocation5 + $0x10] sm:$0xf]
        %v210 = vld [vmem:[#allocation5 + $0x14] sm:$0xf]
        %v211 = vld [vmem:[#allocation5 + $0x18] sm:$0xf]
        %v212 = vld [vmem:[#allocation5 + $0x1c] sm:$0xf]
        %v213 = vld [vmem:[#allocation5 + $0x20] sm:$0xf]
        %v214 = vld [vmem:[#allocation5 + $0x24] sm:$0xf]
        %v215 = vld [vmem:[#allocation5 + $0x28] sm:$0xf]
        %v216 = vld [vmem:[#allocation5 + $0x2c] sm:$0xf]
        %v217 = vld [vmem:[#allocation5 + $0x30] sm:$0xf]
        %v218 = vld [vmem:[#allocation5 + $0x34] sm:$0xf]
        %v219 = vld [vmem:[#allocation5 + $0x38] sm:$0xf]
        %v220 = vld [vmem:[#allocation5 + $0x3c] sm:$0xf]
        %v221 = vld [vmem:[%s155 + $0x8] sm:$0xff]
        %v222 = vld [vmem:[%s155 + $0x30] sm:$0xff]
        %223 = vmax.xlane.f32.xlu0 %v221
        %v224 = vpop.xlane.xlu0 %223
        %225 = vmax.xlane.f32.xlu0 %v222
        %v226 = vpop.xlane.xlu0 %225
        %v227 = vsub.f32 %v221, %v224
        %v228 = vsub.f32 %v222, %v226
        %v229 = vmul.f32 %v227, 1.442695
        %v230 = vpow.pop %v229
        %v231 = vmul.f32 %v228, 1.442695
        %v232 = vpow.pop %v231
        %233 = vadd.xlane.f32.xlu0 %v230
        %v234 = vpop.xlane.xlu0 %233
        %235 = vadd.xlane.f32.xlu0 %v232
        %v236 = vpop.xlane.xlu0 %235
        %v237 = vrcp.pop %v234
        %v238 = vrcp.pop %v236
        %v239 = vmul.f32 %v230, %v237
        %v240 = vmul.f32 %v232, %v238
        %v241 = vpack.c.bf16 %v240, %v239
        %v242 = vld [vmem:[#allocation5 + $0x40] sm:$0xf]
        %v243 = vld [vmem:[#allocation5 + $0x44] sm:$0xf]
        %v244 = vld [vmem:[#allocation5 + $0x48] sm:$0xf]
        %v245 = vld [vmem:[#allocation5 + $0x4c] sm:$0xf]
        %v246 = vld [vmem:[#allocation5 + $0x50] sm:$0xf]
        %v247 = vld [vmem:[#allocation5 + $0x54] sm:$0xf]
        %v248 = vld [vmem:[#allocation5 + $0x58] sm:$0xf]
        %v249 = vld [vmem:[#allocation5 + $0x5c] sm:$0xf]
        %v250 = vld [vmem:[#allocation5 + $0x60] sm:$0xf]
        %v251 = vld [vmem:[#allocation5 + $0x64] sm:$0xf]
        %v252 = vld [vmem:[#allocation5 + $0x68] sm:$0xf]
        %v253 = vld [vmem:[#allocation5 + $0x6c] sm:$0xf]
        %v254 = vld [vmem:[#allocation5 + $0x70] sm:$0xf]
        %v255 = vld [vmem:[#allocation5 + $0x74] sm:$0xf]
        %v256 = vld [vmem:[#allocation5 + $0x78] sm:$0xf]
        %v257 = vld [vmem:[#allocation5 + $0x7c] sm:$0xf]
        %v274 = vunpack.c.l.b16 %v242
        %v275 = vunpack.c.l.b16 %v243
        %v276 = vunpack.c.l.b16 %v244
        %v277 = vunpack.c.l.b16 %v245
        %v278 = vunpack.c.l.b16 %v246
        %v279 = vunpack.c.l.b16 %v247
        %v280 = vunpack.c.l.b16 %v248
        %v281 = vunpack.c.l.b16 %v249
        %v282 = vunpack.c.l.b16 %v250
        %v283 = vunpack.c.l.b16 %v251
        %v284 = vunpack.c.l.b16 %v252
        %v285 = vunpack.c.l.b16 %v253
        %v286 = vunpack.c.l.b16 %v254
        %v287 = vunpack.c.l.b16 %v255
        %v288 = vunpack.c.l.b16 %v256
        %v289 = vunpack.c.l.b16 %v257
        %v290 = vpack.c.b16 %v275, %v274
        %v291 = vpack.c.b16 %v277, %v276
        %v292 = vpack.c.b16 %v279, %v278
        %v293 = vpack.c.b16 %v281, %v280
        %v294 = vpack.c.b16 %v283, %v282
        %v295 = vpack.c.b16 %v285, %v284
        %v296 = vpack.c.b16 %v287, %v286
        %v297 = vpack.c.b16 %v289, %v288
        %306 = vmatpush.bf16.msra.mxu0 %v297
        %307 = vmatpush.bf16.msra.mxu0 %v296
        %308 = vmatpush.bf16.msra.mxu0 %v295
        %309 = vmatpush.bf16.msra.mxu0 %v294
        %310 = vmatpush.bf16.msra.mxu0 %v293
        %311 = vmatpush.bf16.msra.mxu0 %v292
        %312 = vmatpush.bf16.msra.mxu0 %v291
        %313 = vmatpush.bf16.msra.mxu0 %v290
        %314 = vmatmul.bf16.gmra.mxu0 %v241
        %v315 = vpop.f32.mrf.mxu0
        %v316 = vadd.f32 0.0, %v315
        %v317 = vpop.f32.mrf.mxu0
        %v318 = vadd.f32 0.0, %v317
        %319 = vdwg.mxu0
        %v336 = vunpack.c.l.b16 %v205
        %v337 = vunpack.c.l.b16 %v206
        %v338 = vunpack.c.l.b16 %v207
        %v339 = vunpack.c.l.b16 %v208
        %v340 = vunpack.c.l.b16 %v209
        %v341 = vunpack.c.l.b16 %v210
        %v342 = vunpack.c.l.b16 %v211
        %v343 = vunpack.c.l.b16 %v212
        %v344 = vunpack.c.l.b16 %v213
        %v345 = vunpack.c.l.b16 %v214
        %v346 = vunpack.c.l.b16 %v215
        %v347 = vunpack.c.l.b16 %v216
        %v348 = vunpack.c.l.b16 %v217
        %v349 = vunpack.c.l.b16 %v218
        %v350 = vunpack.c.l.b16 %v219
        %v351 = vunpack.c.l.b16 %v220
        %v352 = vpack.c.b16 %v337, %v336
        %v353 = vpack.c.b16 %v339, %v338
        %v354 = vpack.c.b16 %v341, %v340
        %v355 = vpack.c.b16 %v343, %v342
        %v356 = vpack.c.b16 %v345, %v344
        %v357 = vpack.c.b16 %v347, %v346
        %v358 = vpack.c.b16 %v349, %v348
        %v359 = vpack.c.b16 %v351, %v350
        %368 = vmatpush.bf16.msra.mxu0 %v359
        %369 = vmatpush.bf16.msra.mxu0 %v358
        %370 = vmatpush.bf16.msra.mxu0 %v357
        %371 = vmatpush.bf16.msra.mxu0 %v356
        %372 = vmatpush.bf16.msra.mxu0 %v355
        %373 = vmatpush.bf16.msra.mxu0 %v354
        %374 = vmatpush.bf16.msra.mxu0 %v353
        %375 = vmatpush.bf16.msra.mxu0 %v352
        %376 = vmatmul.bf16.gmra.mxu0 %v204
        %v377 = vpop.f32.mrf.mxu0
        %v378 = vadd.f32 %v316, %v377
        %v379 = vpop.f32.mrf.mxu0
        %v380 = vadd.f32 %v318, %v379
        %381 = vdwg.mxu0
        %v382 = vld [vmem:[%s155 + $0x10] sm:$0xff]
        %v383 = vld [vmem:[%s155 + $0x38] sm:$0xff]
        %384 = vmax.xlane.f32.xlu0 %v382
        %v385 = vpop.xlane.xlu0 %384
        %386 = vmax.xlane.f32.xlu0 %v383
        %v387 = vpop.xlane.xlu0 %386
        %v388 = vsub.f32 %v382, %v385
        %v389 = vsub.f32 %v383, %v387
        %v390 = vmul.f32 %v388, 1.442695
        %v391 = vpow.pop %v390
        %v392 = vmul.f32 %v389, 1.442695
        %v393 = vpow.pop %v392
        %394 = vadd.xlane.f32.xlu0 %v391
        %v395 = vpop.xlane.xlu0 %394
        %396 = vadd.xlane.f32.xlu0 %v393
        %v397 = vpop.xlane.xlu0 %396
        %v398 = vrcp.pop %v395
        %v399 = vrcp.pop %v397
        %v400 = vmul.f32 %v391, %v398
        %v401 = vmul.f32 %v393, %v399
        %v402 = vpack.c.bf16 %v401, %v400
        %v403 = vld [vmem:[#allocation5 + $0x80] sm:$0xf]
        %v404 = vld [vmem:[#allocation5 + $0x84] sm:$0xf]
        %v405 = vld [vmem:[#allocation5 + $0x88] sm:$0xf]
        %v406 = vld [vmem:[#allocation5 + $0x8c] sm:$0xf]
        %v407 = vld [vmem:[#allocation5 + $0x90] sm:$0xf]
        %v408 = vld [vmem:[#allocation5 + $0x94] sm:$0xf]
        %v409 = vld [vmem:[#allocation5 + $0x98] sm:$0xf]
        %v410 = vld [vmem:[#allocation5 + $0x9c] sm:$0xf]
        %v411 = vld [vmem:[#allocation5 + $0xa0] sm:$0xf]
        %v412 = vld [vmem:[#allocation5 + $0xa4] sm:$0xf]
        %v413 = vld [vmem:[#allocation5 + $0xa8] sm:$0xf]
        %v414 = vld [vmem:[#allocation5 + $0xac] sm:$0xf]
        %v415 = vld [vmem:[#allocation5 + $0xb0] sm:$0xf]
        %v416 = vld [vmem:[#allocation5 + $0xb4] sm:$0xf]
        %v417 = vld [vmem:[#allocation5 + $0xb8] sm:$0xf]
        %v418 = vld [vmem:[#allocation5 + $0xbc] sm:$0xf]
        %v435 = vunpack.c.l.b16 %v403
        %v436 = vunpack.c.l.b16 %v404
        %v437 = vunpack.c.l.b16 %v405
        %v438 = vunpack.c.l.b16 %v406
        %v439 = vunpack.c.l.b16 %v407
        %v440 = vunpack.c.l.b16 %v408
        %v441 = vunpack.c.l.b16 %v409
        %v442 = vunpack.c.l.b16 %v410
        %v443 = vunpack.c.l.b16 %v411
        %v444 = vunpack.c.l.b16 %v412
        %v445 = vunpack.c.l.b16 %v413
        %v446 = vunpack.c.l.b16 %v414
        %v447 = vunpack.c.l.b16 %v415
        %v448 = vunpack.c.l.b16 %v416
        %v449 = vunpack.c.l.b16 %v417
        %v450 = vunpack.c.l.b16 %v418
        %v451 = vpack.c.b16 %v436, %v435
        %v452 = vpack.c.b16 %v438, %v437
        %v453 = vpack.c.b16 %v440, %v439
        %v454 = vpack.c.b16 %v442, %v441
        %v455 = vpack.c.b16 %v444, %v443
        %v456 = vpack.c.b16 %v446, %v445
        %v457 = vpack.c.b16 %v448, %v447
        %v458 = vpack.c.b16 %v450, %v449
        %467 = vmatpush.bf16.msra.mxu0 %v458
        %468 = vmatpush.bf16.msra.mxu0 %v457
        %469 = vmatpush.bf16.msra.mxu0 %v456
        %470 = vmatpush.bf16.msra.mxu0 %v455
        %471 = vmatpush.bf16.msra.mxu0 %v454
        %472 = vmatpush.bf16.msra.mxu0 %v453
        %473 = vmatpush.bf16.msra.mxu0 %v452
        %474 = vmatpush.bf16.msra.mxu0 %v451
        %475 = vmatmul.bf16.gmra.mxu0 %v402
        %v476 = vpop.f32.mrf.mxu0
        %v477 = vadd.f32 0.0, %v476
        %v478 = vpop.f32.mrf.mxu0
        %v479 = vadd.f32 0.0, %v478
        %480 = vdwg.mxu0
        %v481 = vadd.f32 %v378, %v477
        %v482 = vadd.f32 %v380, %v479
        %v483 = vld [vmem:[%s155 + $0x18] sm:$0xff]
        %v484 = vld [vmem:[%s155 + $0x40] sm:$0xff]
        %485 = vmax.xlane.f32.xlu0 %v483
        %v486 = vpop.xlane.xlu0 %485
        %487 = vmax.xlane.f32.xlu0 %v484
        %v488 = vpop.xlane.xlu0 %487
        %v489 = vsub.f32 %v483, %v486
        %v490 = vsub.f32 %v484, %v488
        %v491 = vmul.f32 %v489, 1.442695
        %v492 = vpow.pop %v491
        %v493 = vmul.f32 %v490, 1.442695
        %v494 = vpow.pop %v493
        %495 = vadd.xlane.f32.xlu0 %v492
        %v496 = vpop.xlane.xlu0 %495
        %497 = vadd.xlane.f32.xlu0 %v494
        %v498 = vpop.xlane.xlu0 %497
        %v499 = vrcp.pop %v496
        %v500 = vrcp.pop %v498
        %v501 = vmul.f32 %v492, %v499
        %v502 = vmul.f32 %v494, %v500
        %v503 = vpack.c.bf16 %v502, %v501
        %v504 = vld [vmem:[#allocation5 + $0xc0] sm:$0xf]
        %v505 = vld [vmem:[#allocation5 + $0xc4] sm:$0xf]
        %v506 = vld [vmem:[#allocation5 + $0xc8] sm:$0xf]
        %v507 = vld [vmem:[#allocation5 + $0xcc] sm:$0xf]
        %v508 = vld [vmem:[#allocation5 + $0xd0] sm:$0xf]
        %v509 = vld [vmem:[#allocation5 + $0xd4] sm:$0xf]
        %v510 = vld [vmem:[#allocation5 + $0xd8] sm:$0xf]
        %v511 = vld [vmem:[#allocation5 + $0xdc] sm:$0xf]
        %v512 = vld [vmem:[#allocation5 + $0xe0] sm:$0xf]
        %v513 = vld [vmem:[#allocation5 + $0xe4] sm:$0xf]
        %v514 = vld [vmem:[#allocation5 + $0xe8] sm:$0xf]
        %v515 = vld [vmem:[#allocation5 + $0xec] sm:$0xf]
        %v516 = vld [vmem:[#allocation5 + $0xf0] sm:$0xf]
        %v517 = vld [vmem:[#allocation5 + $0xf4] sm:$0xf]
        %v518 = vld [vmem:[#allocation5 + $0xf8] sm:$0xf]
        %v519 = vld [vmem:[#allocation5 + $0xfc] sm:$0xf]
        %v536 = vunpack.c.l.b16 %v504
        %v537 = vunpack.c.l.b16 %v505
        %v538 = vunpack.c.l.b16 %v506
        %v539 = vunpack.c.l.b16 %v507
        %v540 = vunpack.c.l.b16 %v508
        %v541 = vunpack.c.l.b16 %v509
        %v542 = vunpack.c.l.b16 %v510
        %v543 = vunpack.c.l.b16 %v511
        %v544 = vunpack.c.l.b16 %v512
        %v545 = vunpack.c.l.b16 %v513
        %v546 = vunpack.c.l.b16 %v514
        %v547 = vunpack.c.l.b16 %v515
        %v548 = vunpack.c.l.b16 %v516
        %v549 = vunpack.c.l.b16 %v517
        %v550 = vunpack.c.l.b16 %v518
        %v551 = vunpack.c.l.b16 %v519
        %v552 = vpack.c.b16 %v537, %v536
        %v553 = vpack.c.b16 %v539, %v538
        %v554 = vpack.c.b16 %v541, %v540
        %v555 = vpack.c.b16 %v543, %v542
        %v556 = vpack.c.b16 %v545, %v544
        %v557 = vpack.c.b16 %v547, %v546
        %v558 = vpack.c.b16 %v549, %v548
        %v559 = vpack.c.b16 %v551, %v550
        %568 = vmatpush.bf16.msra.mxu0 %v559
        %569 = vmatpush.bf16.msra.mxu0 %v558
        %570 = vmatpush.bf16.msra.mxu0 %v557
        %571 = vmatpush.bf16.msra.mxu0 %v556
        %572 = vmatpush.bf16.msra.mxu0 %v555
        %573 = vmatpush.bf16.msra.mxu0 %v554
        %574 = vmatpush.bf16.msra.mxu0 %v553
        %575 = vmatpush.bf16.msra.mxu0 %v552
        %576 = vmatmul.bf16.gmra.mxu0 %v503
        %v577 = vpop.f32.mrf.mxu0
        %v578 = vadd.f32 0.0, %v577
        %v579 = vpop.f32.mrf.mxu0
        %v580 = vadd.f32 0.0, %v579
        %581 = vdwg.mxu0
        %v582 = vadd.f32 %v481, %v578
        %v583 = vadd.f32 %v482, %v580
        %v584 = vld [vmem:[%s155 + $0x20] sm:$0xff]
        %v585 = vld [vmem:[%s155 + $0x48] sm:$0xff]
        %586 = vmax.xlane.f32.xlu0 %v584
        %v587 = vpop.xlane.xlu0 %586
        %588 = vmax.xlane.f32.xlu0 %v585
        %v589 = vpop.xlane.xlu0 %588
        %v590 = vsub.f32 %v584, %v587
        %v591 = vsub.f32 %v585, %v589
        %v592 = vmul.f32 %v590, 1.442695
        %v593 = vpow.pop %v592
        %v594 = vmul.f32 %v591, 1.442695
        %v595 = vpow.pop %v594
        %596 = vadd.xlane.f32.xlu0 %v593
        %v597 = vpop.xlane.xlu0 %596
        %598 = vadd.xlane.f32.xlu0 %v595
        %v599 = vpop.xlane.xlu0 %598
        %v600 = vrcp.pop %v597
        %v601 = vrcp.pop %v599
        %v602 = vmul.f32 %v593, %v600
        %v603 = vmul.f32 %v595, %v601
        %v604 = vpack.c.bf16 %v603, %v602
        %v605 = vld [vmem:[#allocation5 + $0x100] sm:$0xf]
        %v606 = vld [vmem:[#allocation5 + $0x104] sm:$0xf]
        %v607 = vld [vmem:[#allocation5 + $0x108] sm:$0xf]
        %v608 = vld [vmem:[#allocation5 + $0x10c] sm:$0xf]
        %v609 = vld [vmem:[#allocation5 + $0x110] sm:$0xf]
        %v610 = vld [vmem:[#allocation5 + $0x114] sm:$0xf]
        %v611 = vld [vmem:[#allocation5 + $0x118] sm:$0xf]
        %v612 = vld [vmem:[#allocation5 + $0x11c] sm:$0xf]
        %v613 = vld [vmem:[#allocation5 + $0x120] sm:$0xf]
        %v614 = vld [vmem:[#allocation5 + $0x124] sm:$0xf]
        %v615 = vld [vmem:[#allocation5 + $0x128] sm:$0xf]
        %v616 = vld [vmem:[#allocation5 + $0x12c] sm:$0xf]
        %v617 = vld [vmem:[#allocation5 + $0x130] sm:$0xf]
        %v618 = vld [vmem:[#allocation5 + $0x134] sm:$0xf]
        %v619 = vld [vmem:[#allocation5 + $0x138] sm:$0xf]
        %v620 = vld [vmem:[#allocation5 + $0x13c] sm:$0xf]
        %v637 = vunpack.c.l.b16 %v605
        %v638 = vunpack.c.l.b16 %v606
        %v639 = vunpack.c.l.b16 %v607
        %v640 = vunpack.c.l.b16 %v608
        %v641 = vunpack.c.l.b16 %v609
        %v642 = vunpack.c.l.b16 %v610
        %v643 = vunpack.c.l.b16 %v611
        %v644 = vunpack.c.l.b16 %v612
        %v645 = vunpack.c.l.b16 %v613
        %v646 = vunpack.c.l.b16 %v614
        %v647 = vunpack.c.l.b16 %v615
        %v648 = vunpack.c.l.b16 %v616
        %v649 = vunpack.c.l.b16 %v617
        %v650 = vunpack.c.l.b16 %v618
        %v651 = vunpack.c.l.b16 %v619
        %v652 = vunpack.c.l.b16 %v620
        %v653 = vpack.c.b16 %v638, %v637
        %v654 = vpack.c.b16 %v640, %v639
        %v655 = vpack.c.b16 %v642, %v641
        %v656 = vpack.c.b16 %v644, %v643
        %v657 = vpack.c.b16 %v646, %v645
        %v658 = vpack.c.b16 %v648, %v647
        %v659 = vpack.c.b16 %v650, %v649
        %v660 = vpack.c.b16 %v652, %v651
        %669 = vmatpush.bf16.msra.mxu0 %v660
        %670 = vmatpush.bf16.msra.mxu0 %v659
        %671 = vmatpush.bf16.msra.mxu0 %v658
        %672 = vmatpush.bf16.msra.mxu0 %v657
        %673 = vmatpush.bf16.msra.mxu0 %v656
        %674 = vmatpush.bf16.msra.mxu0 %v655
        %675 = vmatpush.bf16.msra.mxu0 %v654
        %676 = vmatpush.bf16.msra.mxu0 %v653
        %677 = vmatmul.bf16.gmra.mxu0 %v604
        %v678 = vpop.f32.mrf.mxu0
        %v679 = vadd.f32 0.0, %v678
        %v680 = vpop.f32.mrf.mxu0
        %v681 = vadd.f32 0.0, %v680
        %682 = vdwg.mxu0
        %v683 = vadd.f32 %v582, %v679
        %v684 = vadd.f32 %v583, %v681
        %685 = vst [vmem:[%s181] sm:$0xff] %v683
        %686 = vst [vmem:[%s181 + $0x8] sm:$0xff] %v684
        %s687 = sand.u32 %s75, 1
        %s688 = scalar_lea.sflag [#allocation4], %s687
        %s689 = sand.u32 %s75, 1
        %s690 = smul.addr %s689, 16
        %s691 = scalar_lea.vmem [#allocation7], %s690
        // Predicated region
        $region37: #{tpu_custom_call.1} parent=27 // pred_check
          %p692 = pneg %p85
        $region38: #{tpu_custom_call.1} parent=27 // pred_check_branch
          %694 = sbr.rel (%p692) target = $region40
        $region39: #{tpu_custom_call.1} parent=27 // pred_region
          %s695 = smul.u32 2, %s20
          %697 = vsyncadd %s688, 0
          %s698 = smul.addr %s695, 8
          %s699 = scalar_lea.hbm %s2, %s698
          %s700 = sshll.u32 %s691, 4
          %s701 = int_to_ptr.vmem [resolvable:$true] %s700
          %s702 = sshll.u32 %s699, 4
          %s703 = int_to_ptr.hbm [resolvable:$true] %s702
          %708 = dma.vmem_to_hbm [thread:$0]  %s701, 256, %s703, %s688, 128, 128, 8
        $region40: #{tpu_custom_call.1} parent=27 // pred_fallthru
          _
      $region28: #{tpu_custom_call.1} parent=5 // pred_fallthru
        _
      %p709 = scmp.le.s32.totalorder 2, %s15
      // Predicated region
      $region41: #{tpu_custom_call.1} parent=5 // pred_check
        %p710 = pneg %p709
      $region42: #{tpu_custom_call.1} parent=5 // pred_check_branch
        %712 = sbr.rel (%p710) target = $region44
      $region43: #{tpu_custom_call.1} parent=5 // pred_region
        %s713 = ssub.s32 %s15, 2
        // Predicated region
        $region45: #{tpu_custom_call.1} parent=43 // pred_check
          %p714 = pneg %p91
        $region46: #{tpu_custom_call.1} parent=43 // pred_check_branch
          %716 = sbr.rel (%p714) target = $region48
        $region47: #{tpu_custom_call.1} parent=43 // pred_region
          %s717 = sand.u32 %s76, 1
          %s718 = scalar_lea.sflag [#allocation4], %s717
          %s719 = sand.u32 %s76, 1
          %s720 = smul.addr %s719, 16
          %s721 = scalar_lea.vmem [#allocation7], %s720
          %723 = dma.done %s718, 256
        $region48: #{tpu_custom_call.1} parent=43 // pred_fallthru
          _
      $region44: #{tpu_custom_call.1} parent=5 // pred_fallthru
        _
    $region6: #{tpu_custom_call.1} parent=1 // loop_footer
      %s19 = sadd.s32 1, %s15
    $region7: #{tpu_custom_call.1} parent=1 // loop_footer_branch
      %14 = sbr.rel target = $region3
    $region8: #{tpu_custom_call.1} parent=1 // loop_exit
      _
    %724 = vsyncpa [#allocation3], 1
    %s725 = scalar_lea.sflag [#allocation3], 1
    %726 = vsyncpa %s725, 1
    %727 = vsyncpa [#allocation6], 1
    %728 = vsyncpa [#allocation4], 1
    %s729 = scalar_lea.sflag [#allocation4], 1
    %730 = vsyncpa %s729, 1

</llo_original>
